<compile_context>
chip_gen: v7x
topology: tpu7x:2x2x1
jax: 0.10.0
libtpu: 0.0.40
codegen_flags: <defaults>
</compile_context>

<pallas_src>
import jax
import jax.numpy as jnp
from jax.experimental import pallas as pl
from jax.experimental.pallas import tpu as pltpu


_SQRT_2_OVER_PI = 0.7978845608028654


def _gelu_tanh(x):
    # tanh-approximate GELU; tanh lowers to the EUP (free slot vs VPU/MXU).
    return 0.5 * x * (1.0 + jnp.tanh(_SQRT_2_OVER_PI * (x + 0.044715 * x * x * x)))


# ---------------------------------------------------------------------------
# Fused MLP kernel: out = gelu(x @ W1 + b1) @ W2 + b2   (one row-tile per step)
# ---------------------------------------------------------------------------
def _mlp_kernel(x_ref, w1_ref, b1_ref, w2_ref, b2_ref, o_ref):
    # fc1: bf16 MXU matmul, f32 accumulation
    h = jnp.dot(x_ref[...], w1_ref[...], preferred_element_type=jnp.float32)
    h = _gelu_tanh(h + b1_ref[...])
    # fc2: hidden activation stays in VMEM/vregs (never written to HBM)
    out = jnp.dot(h.astype(w2_ref.dtype), w2_ref[...],
                  preferred_element_type=jnp.float32)
    o_ref[...] = out + b2_ref[...]


def _round_up(x, m):
    return (x + m - 1) // m * m


def mlp_forward(x, params, *, compute_dtype=jnp.bfloat16):
    """Mlp.forward in eval mode: fc2(gelu(fc1(x))). Dropout == identity."""
    # TODO(synk): training-mode Dropout(p=0.3) is not implemented; this is the
    # eval/inference path where nn.Dropout is the identity.
    orig_shape = x.shape
    d_in = orig_shape[-1]
    x2d = x.reshape(-1, d_in)
    M = x2d.shape[0]

    w1 = params["fc1_w"]          # (hidden, in)  - PyTorch Linear layout
    b1 = params["fc1_b"]          # (hidden,)
    w2 = params["fc2_w"]          # (out, hidden)
    b2 = params["fc2_b"]          # (out,)
    hidden = w1.shape[0]
    d_out = w2.shape[0]

    # Large M tiles (>=512 rows when available). Pad M up to a tile multiple
    # (padded rows are computed then sliced off) instead of collapsing to a
    # single grid step.
    tm = min(512, _round_up(M, 8))
    m_pad = _round_up(M, tm)
    if m_pad != M:
        x2d = jnp.pad(x2d, ((0, m_pad - M), (0, 0)))

    # bf16 MXU inputs; biases stay f32 and are added after f32 accumulation.
    x2d = x2d.astype(compute_dtype)
    w1_t = jnp.transpose(w1).astype(compute_dtype)       # (in, hidden)
    w2_t = jnp.transpose(w2).astype(compute_dtype)       # (hidden, out)
    b1r = b1.reshape(1, hidden).astype(jnp.float32)
    b2r = b2.reshape(1, d_out).astype(jnp.float32)

    out2d = pl.pallas_call(
        _mlp_kernel,
        out_shape=jax.ShapeDtypeStruct((m_pad, d_out), jnp.float32),
        grid=(m_pad // tm,),
        in_specs=[
            pl.BlockSpec((tm, d_in), lambda i: (i, 0)),
            pl.BlockSpec((d_in, hidden), lambda i: (0, 0)),   # constant weights
            pl.BlockSpec((1, hidden), lambda i: (0, 0)),
            pl.BlockSpec((hidden, d_out), lambda i: (0, 0)),
            pl.BlockSpec((1, d_out), lambda i: (0, 0)),
        ],
        out_specs=pl.BlockSpec((tm, d_out), lambda i: (i, 0)),
        compiler_params=pltpu.CompilerParams(
            dimension_semantics=("parallel",)),
    )(x2d, w1_t, b1r, w2_t, b2r)

    out2d = out2d[:M]
    return out2d.reshape(*orig_shape[:-1], d_out)


# ---------------------------------------------------------------------------
# Pure-JAX reference (f32, same tanh-approx GELU) for a correctness check
# ---------------------------------------------------------------------------
def reference_forward(x, params):
    x32 = x.astype(jnp.float32)
    h = x32 @ params["fc1_w"].astype(jnp.float32).T + params["fc1_b"]
    h = _gelu_tanh(h)
    out = h @ params["fc2_w"].astype(jnp.float32).T + params["fc2_b"]
    return out


if __name__ == "__main__":
    key = jax.random.PRNGKey(0)
    k_x, k_w1, k_b1, k_w2, k_b2 = jax.random.split(key, 5)

    # Small ViT-style token batch: (batch, seq, channels). out_features
    # defaults to in_features (as in the PyTorch module). Feature dims are
    # multiples of 128 to keep stores lane-dense.
    B, S = 2, 8
    in_features = 128
    hidden_features = 256
    out_features = in_features

    x = jax.random.normal(k_x, (B, S, in_features), jnp.float32)
    params = {
        "fc1_w": 0.05 * jax.random.normal(
            k_w1, (hidden_features, in_features), jnp.float32),
        "fc1_b": 0.05 * jax.random.normal(k_b1, (hidden_features,), jnp.float32),
        "fc2_w": 0.05 * jax.random.normal(
            k_w2, (out_features, hidden_features), jnp.float32),
        "fc2_b": 0.05 * jax.random.normal(k_b2, (out_features,), jnp.float32),
    }

    out = mlp_forward(x, params)
    out = jax.block_until_ready(out)
    assert out.shape == (B, S, out_features), out.shape

    ref = reference_forward(x, params)
    max_err = float(jnp.max(jnp.abs(out - ref)))
    assert jnp.allclose(out, ref, rtol=2e-2, atol=2e-2), max_err

    print("KERNEL_OK")
</pallas_src>

<mosaic_0001>
module attributes {stable_mosaic.version = 11 : i64} {
  func.func @_mlp_kernel(%arg0: i32, %arg1: memref<16x128xbf16, #tpu.memory_space<vmem>>, %arg2: memref<128x256xbf16, #tpu.memory_space<vmem>>, %arg3: memref<1x256xf32, #tpu.memory_space<vmem>>, %arg4: memref<256x128xbf16, #tpu.memory_space<vmem>>, %arg5: memref<1x128xf32, #tpu.memory_space<vmem>>, %arg6: memref<16x128xf32, #tpu.memory_space<vmem>>) attributes {dimension_semantics = [#tpu.dimension_semantics<parallel>], iteration_bounds = array<i64: 1>, scalar_prefetch = 0 : i64, scratch_operands = 0 : i64, tpu.core_type = #tpu.core_type<tc>, window_params = [{transform_indices = @transform_0, window_bounds = array<i64: 16, 128>}, {pipeline_mode = #tpu.pipeline_mode<synchronous>, transform_indices = @transform_1, window_bounds = array<i64: 128, 256>}, {pipeline_mode = #tpu.pipeline_mode<synchronous>, transform_indices = @transform_2, window_bounds = array<i64: 1, 256>}, {pipeline_mode = #tpu.pipeline_mode<synchronous>, transform_indices = @transform_3, window_bounds = array<i64: 256, 128>}, {pipeline_mode = #tpu.pipeline_mode<synchronous>, transform_indices = @transform_4, window_bounds = array<i64: 1, 128>}, {transform_indices = @transform_5, window_bounds = array<i64: 16, 128>}]} {
    %c0 = arith.constant 0 : index
    %c0_0 = arith.constant 0 : index
    %0 = vector.load %arg1[%c0, %c0_0] : memref<16x128xbf16, #tpu.memory_space<vmem>>, vector<16x128xbf16>
    %c0_1 = arith.constant 0 : index
    %c0_2 = arith.constant 0 : index
    %1 = vector.load %arg2[%c0_1, %c0_2] : memref<128x256xbf16, #tpu.memory_space<vmem>>, vector<128x256xbf16>
    %cst = arith.constant dense<0.000000e+00> : vector<16x256xf32>
    %2 = tpu.matmul %0, %1, %cst {dimension_numbers = #tpu.dot_dimension_numbers<[1], [0], [0], [1], [0, 0, 1, 1], [], []>} : vector<16x128xbf16>, vector<128x256xbf16>, vector<16x256xf32> -> vector<16x256xf32>
    %c0_3 = arith.constant 0 : index
    %c0_4 = arith.constant 0 : index
    %3 = vector.load %arg3[%c0_3, %c0_4] : memref<1x256xf32, #tpu.memory_space<vmem>>, vector<1x256xf32>
    %4 = vector.broadcast %3 : vector<1x256xf32> to vector<16x256xf32>
    %5 = arith.addf %2, %4 : vector<16x256xf32>
    %cst_5 = arith.constant 5.000000e-01 : f32
    %6 = vector.broadcast %cst_5 : f32 to vector<16x256xf32>
    %7 = arith.mulf %6, %5 : vector<16x256xf32>
    %cst_6 = arith.constant 4.471500e-02 : f32
    %8 = vector.broadcast %cst_6 : f32 to vector<16x256xf32>
    %9 = arith.mulf %8, %5 : vector<16x256xf32>
    %10 = arith.mulf %9, %5 : vector<16x256xf32>
    %11 = arith.mulf %10, %5 : vector<16x256xf32>
    %12 = arith.addf %5, %11 : vector<16x256xf32>
    %cst_7 = arith.constant 0.797884583 : f32
    %13 = vector.broadcast %cst_7 : f32 to vector<16x256xf32>
    %14 = arith.mulf %13, %12 : vector<16x256xf32>
    %15 = math.tanh %14 : vector<16x256xf32>
    %cst_8 = arith.constant 1.000000e+00 : f32
    %16 = vector.broadcast %cst_8 : f32 to vector<16x256xf32>
    %17 = arith.addf %16, %15 : vector<16x256xf32>
    %18 = arith.mulf %7, %17 : vector<16x256xf32>
    %19 = arith.truncf %18 : vector<16x256xf32> to vector<16x256xbf16>
    %c0_9 = arith.constant 0 : index
    %c0_10 = arith.constant 0 : index
    %20 = vector.load %arg4[%c0_9, %c0_10] : memref<256x128xbf16, #tpu.memory_space<vmem>>, vector<256x128xbf16>
    %cst_11 = arith.constant dense<0.000000e+00> : vector<16x128xf32>
    %21 = tpu.matmul %19, %20, %cst_11 {dimension_numbers = #tpu.dot_dimension_numbers<[1], [0], [0], [1], [0, 0, 1, 1], [], []>} : vector<16x256xbf16>, vector<256x128xbf16>, vector<16x128xf32> -> vector<16x128xf32>
    %c0_12 = arith.constant 0 : index
    %c0_13 = arith.constant 0 : index
    %22 = vector.load %arg5[%c0_12, %c0_13] : memref<1x128xf32, #tpu.memory_space<vmem>>, vector<1x128xf32>
    %23 = vector.broadcast %22 : vector<1x128xf32> to vector<16x128xf32>
    %24 = arith.addf %21, %23 : vector<16x128xf32>
    %c0_14 = arith.constant 0 : index
    %c0_15 = arith.constant 0 : index
    %25 = vector.load %arg6[%c0_14, %c0_15] : memref<16x128xf32, #tpu.memory_space<vmem>>, vector<16x128xf32>
    tpu.vector_store %arg6[%c0_14, %c0_15], %24 {strides = array<i32>} : memref<16x128xf32, #tpu.memory_space<vmem>>, vector<16x128xf32>,
    return
  }
  func.func @transform_0(%arg0: i32) -> (i32, i32) {
    %c0_i32 = arith.constant 0 : i32
    %c0_i32_0 = arith.constant 0 : i32
    return %arg0, %c0_i32 : i32, i32
  }
  func.func @transform_1(%arg0: i32) -> (i32, i32) {
    %c0_i32 = arith.constant 0 : i32
    %c0_i32_0 = arith.constant 0 : i32
    %c0_i32_1 = arith.constant 0 : i32
    return %c0_i32, %c0_i32_0 : i32, i32
  }
  func.func @transform_2(%arg0: i32) -> (i32, i32) {
    %c0_i32 = arith.constant 0 : i32
    %c0_i32_0 = arith.constant 0 : i32
    %c0_i32_1 = arith.constant 0 : i32
    return %c0_i32, %c0_i32_0 : i32, i32
  }
  func.func @transform_3(%arg0: i32) -> (i32, i32) {
    %c0_i32 = arith.constant 0 : i32
    %c0_i32_0 = arith.constant 0 : i32
    %c0_i32_1 = arith.constant 0 : i32
    return %c0_i32, %c0_i32_0 : i32, i32
  }
  func.func @transform_4(%arg0: i32) -> (i32, i32) {
    %c0_i32 = arith.constant 0 : i32
    %c0_i32_0 = arith.constant 0 : i32
    %c0_i32_1 = arith.constant 0 : i32
    return %c0_i32, %c0_i32_0 : i32, i32
  }
  func.func @transform_5(%arg0: i32) -> (i32, i32) {
    %c0_i32 = arith.constant 0 : i32
    %c0_i32_0 = arith.constant 0 : i32
    return %arg0, %c0_i32 : i32, i32
  }
}

</mosaic_0001>

<llo_original>
// kernel: tpu_custom_call.1
$region0: #{tpu_custom_call.1}
  #allocation0 [shape = 'u32[]', space=smem, size = 0x4, offset = 0x4, fixed_abs, tag = 'smem constant byte address 0x4 - core index']
  #allocation1 [shape = 'u32[144,128]{1,0:T(1,128)}', space=vmem, size = 0x12000, scoped, tag = 'internal scratch']
  %s0 = inlined_call_operand.hbm [shape: bf16[16,128], index: 0, kind: input, shape index: {}]
  %s1 = inlined_call_operand.hbm [shape: bf16[128,256], index: 1, kind: input, shape index: {}]
  %s2 = inlined_call_operand.vmem [shape: f32[1,256], index: 2, kind: input, shape index: {}]
  %s3 = inlined_call_operand.hbm [shape: bf16[256,128], index: 3, kind: input, shape index: {}]
  %s4 = inlined_call_operand.vmem [shape: f32[1,128], index: 4, kind: input, shape index: {}]
  %s5 = inlined_call_operand.hbm [shape: f32[16,128], index: 5, kind: output, shape index: {}]
  %s6 = sld [smem:[#allocation0]]
  $region42: #{tpu_custom_call.1} parent=0
    _
  %s8 = ssub.s32 1, %s6
  %s9 = scalar_select 0, %s8, %s6
  $region1: #{tpu_custom_call.1} parent=0
    #allocation2 [shape = 'u8[4096]{0}', space=vmem, size = 0x1000, scoped, tag = 'input window, operand 0, single buffered']
    #allocation3 [shape = 's32[1]{0}', space=sflag, size = 0x4, scoped, tag = 'scoped memory for tpu_custom_call.1']
    #allocation4 [shape = 's32[1]{0}', space=sflag, size = 0x4, scoped, tag = 'scoped memory for tpu_custom_call.1']
    #allocation5 [shape = 'u8[65536]{0}', space=vmem, size = 0x10000, scoped, tag = 'input window, operand 1, single buffered']
    #allocation6 [shape = 's32[1]{0}', space=sflag, size = 0x4, scoped, tag = 'scoped memory for tpu_custom_call.1']
    #allocation7 [shape = 'u8[65536]{0}', space=vmem, size = 0x10000, scoped, tag = 'input window, operand 3, single buffered']
    #allocation8 [shape = 'u8[8192]{0}', space=vmem, size = 0x2000, scoped, tag = 'output window, operand 0, single buffered']
    %10 = vsyncpa [#allocation3], 0
    %11 = vsyncpa [#allocation6], 0
    %12 = vsyncpa [#allocation4], 0
    // Predicated region
    $region2: #{tpu_custom_call.1} parent=1 // pred_check
      _
    $region3: #{tpu_custom_call.1} parent=1 // pred_check_branch
      %14 = sbr.rel (0) target = $region5
    $region4: #{tpu_custom_call.1} parent=1 // pred_region
      %s16 = ssub.s32 128, 128
      %17 = vsyncadd [#allocation3], %s16
      %s18 = sshll.u32 [#allocation2], 4
      %s19 = int_to_ptr.vmem [resolvable:$true] %s18
      %24 = dma.hbm_to_vmem [thread:$0]  %s0, 128, %s19, [#allocation3], 64, 64, 4
    $region5: #{tpu_custom_call.1} parent=1 // pred_fallthru
      _
    // Predicated region
    $region6: #{tpu_custom_call.1} parent=1 // pred_check
      _
    $region7: #{tpu_custom_call.1} parent=1 // pred_check_branch
      %26 = sbr.rel (0) target = $region9
    $region8: #{tpu_custom_call.1} parent=1 // pred_region
      %s28 = ssub.s32 2048, 2048
      %29 = vsyncadd [#allocation6], %s28
      %s30 = sshll.u32 [#allocation5], 4
      %s31 = int_to_ptr.vmem [resolvable:$true] %s30
      %36 = dma.hbm_to_vmem [thread:$0]  %s1, 2048, %s31, [#allocation6], 128, 128, 8
    $region9: #{tpu_custom_call.1} parent=1 // pred_fallthru
      _
    // Predicated region
    $region10: #{tpu_custom_call.1} parent=1 // pred_check
      _
    $region11: #{tpu_custom_call.1} parent=1 // pred_check_branch
      %38 = sbr.rel (0) target = $region13
    $region12: #{tpu_custom_call.1} parent=1 // pred_region
      _
    $region13: #{tpu_custom_call.1} parent=1 // pred_fallthru
      _
    // Predicated region
    $region14: #{tpu_custom_call.1} parent=1 // pred_check
      _
    $region15: #{tpu_custom_call.1} parent=1 // pred_check_branch
      %40 = sbr.rel (0) target = $region17
    $region16: #{tpu_custom_call.1} parent=1 // pred_region
      %s42 = ssub.s32 2048, 2048
      %43 = vsyncadd [#allocation6], %s42
      %s44 = sshll.u32 [#allocation7], 4
      %s45 = int_to_ptr.vmem [resolvable:$true] %s44
      %50 = dma.hbm_to_vmem [thread:$0]  %s3, 2048, %s45, [#allocation6], 64, 64, 4
    $region17: #{tpu_custom_call.1} parent=1 // pred_fallthru
      _
    // Predicated region
    $region18: #{tpu_custom_call.1} parent=1 // pred_check
      _
    $region19: #{tpu_custom_call.1} parent=1 // pred_check_branch
      %52 = sbr.rel (0) target = $region21
    $region20: #{tpu_custom_call.1} parent=1 // pred_region
      _
    $region21: #{tpu_custom_call.1} parent=1 // pred_fallthru
      _
    // Predicated region
    $region22: #{tpu_custom_call.1} parent=1 // pred_check
      _
    $region23: #{tpu_custom_call.1} parent=1 // pred_check_branch
      %54 = sbr.rel (0) target = $region25
    $region24: #{tpu_custom_call.1} parent=1 // pred_region
      %55 = dma.done [#allocation3], 128
    $region25: #{tpu_custom_call.1} parent=1 // pred_fallthru
      _
    // Predicated region
    $region26: #{tpu_custom_call.1} parent=1 // pred_check
      _
    $region27: #{tpu_custom_call.1} parent=1 // pred_check_branch
      %57 = sbr.rel (0) target = $region29
    $region28: #{tpu_custom_call.1} parent=1 // pred_region
      %58 = dma.done [#allocation6], 2048
    $region29: #{tpu_custom_call.1} parent=1 // pred_fallthru
      _
    // Predicated region
    $region30: #{tpu_custom_call.1} parent=1 // pred_check
      _
    $region31: #{tpu_custom_call.1} parent=1 // pred_check_branch
      %60 = sbr.rel (0) target = $region33
    $region32: #{tpu_custom_call.1} parent=1 // pred_region
      %61 = dma.done [#allocation6], 2048
    $region33: #{tpu_custom_call.1} parent=1 // pred_fallthru
      _
    %v63 = vld [vmem:[#allocation2] sm:$0xf]
    %v64 = vld [vmem:[#allocation2 + $0x4] sm:$0xf]
    %v65 = vld [vmem:[#allocation5] sm:$0xff]
    %v66 = vld [vmem:[#allocation5 + $0x8] sm:$0xff]
    %v67 = vld [vmem:[#allocation5 + $0x10] sm:$0xff]
    %v68 = vld [vmem:[#allocation5 + $0x18] sm:$0xff]
    %v69 = vld [vmem:[#allocation5 + $0x20] sm:$0xff]
    %v70 = vld [vmem:[#allocation5 + $0x28] sm:$0xff]
    %v71 = vld [vmem:[#allocation5 + $0x30] sm:$0xff]
    %v72 = vld [vmem:[#allocation5 + $0x38] sm:$0xff]
    %v73 = vld [vmem:[#allocation5 + $0x40] sm:$0xff]
    %v74 = vld [vmem:[#allocation5 + $0x48] sm:$0xff]
    %v75 = vld [vmem:[#allocation5 + $0x50] sm:$0xff]
    %v76 = vld [vmem:[#allocation5 + $0x58] sm:$0xff]
    %v77 = vld [vmem:[#allocation5 + $0x60] sm:$0xff]
    %v78 = vld [vmem:[#allocation5 + $0x68] sm:$0xff]
    %v79 = vld [vmem:[#allocation5 + $0x70] sm:$0xff]
    %v80 = vld [vmem:[#allocation5 + $0x78] sm:$0xff]
    %v81 = vld [vmem:[%s2] sm:$0x3]
    %v83 = vlaneseq
    %v84 = vshrl.u32 %v83, 7
    %v85 = vsub.s32 0, %v84
    %v86 = vrot.slane %v81, %v85
    %v87 = vlaneseq
    %v88 = vshrl.u32 %v87, 7
    %v89 = vsub.s32 1, %v88
    %v90 = vrot.slane %v81, %v89
    %v95 = vunpack.c.l.b16 %v63
    %v96 = vunpack.c.l.b16 %v64
    %v97 = vpack.c.b16 %v96, %v95
    %v115 = vunpack.c.l.b16 %v65
    %v116 = vunpack.c.h.b16 %v65
    %v117 = vunpack.c.l.b16 %v66
    %v118 = vunpack.c.h.b16 %v66
    %v119 = vunpack.c.l.b16 %v67
    %v120 = vunpack.c.h.b16 %v67
    %v121 = vunpack.c.l.b16 %v68
    %v122 = vunpack.c.h.b16 %v68
    %v123 = vunpack.c.l.b16 %v69
    %v124 = vunpack.c.h.b16 %v69
    %v125 = vunpack.c.l.b16 %v70
    %v126 = vunpack.c.h.b16 %v70
    %v127 = vunpack.c.l.b16 %v71
    %v128 = vunpack.c.h.b16 %v71
    %v129 = vunpack.c.l.b16 %v72
    %v130 = vunpack.c.h.b16 %v72
    %v131 = vunpack.c.l.b16 %v73
    %v132 = vunpack.c.h.b16 %v73
    %v133 = vunpack.c.l.b16 %v74
    %v134 = vunpack.c.h.b16 %v74
    %v135 = vunpack.c.l.b16 %v75
    %v136 = vunpack.c.h.b16 %v75
    %v137 = vunpack.c.l.b16 %v76
    %v138 = vunpack.c.h.b16 %v76
    %v139 = vunpack.c.l.b16 %v77
    %v140 = vunpack.c.h.b16 %v77
    %v141 = vunpack.c.l.b16 %v78
    %v142 = vunpack.c.h.b16 %v78
    %v143 = vunpack.c.l.b16 %v79
    %v144 = vunpack.c.h.b16 %v79
    %v145 = vunpack.c.l.b16 %v80
    %v146 = vunpack.c.h.b16 %v80
    %v147 = vpack.c.b16 %v117, %v115
    %v148 = vpack.c.b16 %v118, %v116
    %v149 = vpack.c.b16 %v121, %v119
    %v150 = vpack.c.b16 %v122, %v120
    %v151 = vpack.c.b16 %v125, %v123
    %v152 = vpack.c.b16 %v126, %v124
    %v153 = vpack.c.b16 %v129, %v127
    %v154 = vpack.c.b16 %v130, %v128
    %v155 = vpack.c.b16 %v133, %v131
    %v156 = vpack.c.b16 %v134, %v132
    %v157 = vpack.c.b16 %v137, %v135
    %v158 = vpack.c.b16 %v138, %v136
    %v159 = vpack.c.b16 %v141, %v139
    %v160 = vpack.c.b16 %v142, %v140
    %v161 = vpack.c.b16 %v145, %v143
    %v162 = vpack.c.b16 %v146, %v144
    %179 = vmatprep.subr.bf16.mxu0 %v148
    %180 = vmatpush1.bf16.msra.mxu0 %v147
    %181 = vmatprep.subr.bf16.mxu0 %v150
    %182 = vmatpush1.bf16.msra.mxu0 %v149
    %183 = vmatprep.subr.bf16.mxu0 %v152
    %184 = vmatpush1.bf16.msra.mxu0 %v151
    %185 = vmatprep.subr.bf16.mxu0 %v154
    %186 = vmatpush1.bf16.msra.mxu0 %v153
    %187 = vmatprep.subr.bf16.mxu0 %v156
    %188 = vmatpush1.bf16.msra.mxu0 %v155
    %189 = vmatprep.subr.bf16.mxu0 %v158
    %190 = vmatpush1.bf16.msra.mxu0 %v157
    %191 = vmatprep.subr.bf16.mxu0 %v160
    %192 = vmatpush1.bf16.msra.mxu0 %v159
    %193 = vmatprep.subr.bf16.mxu0 %v162
    %194 = vmatpush1.bf16.msra.mxu0 %v161
    %195 = vmatprep.subr.bf16.mxu0 0
    %196 = vmatpush1.bf16.msra.mxu0 0
    %197 = vmatprep.subr.bf16.mxu0 0
    %198 = vmatpush1.bf16.msra.mxu0 0
    %199 = vmatprep.subr.bf16.mxu0 0
    %200 = vmatpush1.bf16.msra.mxu0 0
    %201 = vmatprep.subr.bf16.mxu0 0
    %202 = vmatpush1.bf16.msra.mxu0 0
    %203 = vmatprep.subr.bf16.mxu0 0
    %204 = vmatpush1.bf16.msra.mxu0 0
    %205 = vmatprep.subr.bf16.mxu0 0
    %206 = vmatpush1.bf16.msra.mxu0 0
    %207 = vmatprep.subr.bf16.mxu0 0
    %208 = vmatpush1.bf16.msra.mxu0 0
    %209 = vmatprep.subr.bf16.mxu0 0
    %210 = vmatpush1.bf16.msra.mxu0 0
    %211 = vmatprep.mubr.bf16.mxu0 0
    %212 = vmatmul.mubr.bf16.gmra.mrb[0].mxu0 %v97
    %v213 = vpop.f32.mrb[0].mxu0
    %v214 = vadd.f32 %v86, %v213
    %v215 = vpop.f32.mrb[0].mxu0
    %v216 = vadd.f32 %v90, %v215
    %v217 = vpop.f32.mrb[0].mxu0
    %v218 = vadd.f32 %v86, %v217
    %v219 = vpop.f32.mrb[0].mxu0
    %v220 = vadd.f32 %v90, %v219
    %221 = vdwg.mxu0
    %v222 = vmul.f32 %v214, 0.5
    %v223 = vmul.f32 %v216, 0.5
    %v224 = vmul.f32 %v218, 0.5
    %v225 = vmul.f32 %v220, 0.5
    %v226 = vmul.f32 %v214, 0.044715
    %v227 = vmul.f32 %v216, 0.044715
    %v228 = vmul.f32 %v218, 0.044715
    %v229 = vmul.f32 %v220, 0.044715
    %v230 = vmul.f32 %v226, %v214
    %v231 = vmul.f32 %v227, %v216
    %v232 = vmul.f32 %v228, %v218
    %v233 = vmul.f32 %v229, %v220
    %v234 = vmul.f32 %v230, %v214
    %v235 = vmul.f32 %v231, %v216
    %v236 = vmul.f32 %v232, %v218
    %v237 = vmul.f32 %v233, %v220
    %v238 = vadd.f32 %v214, %v234
    %v239 = vadd.f32 %v216, %v235
    %v240 = vadd.f32 %v218, %v236
    %v241 = vadd.f32 %v220, %v237
    %v242 = vmul.f32 %v238, 0.7978846
    %v243 = vmul.f32 %v239, 0.7978846
    %v244 = vmul.f32 %v240, 0.7978846
    %v245 = vmul.f32 %v241, 0.7978846
    %v246 = vtanh.pop %v242
    %v247 = vtanh.pop %v243
    %v248 = vtanh.pop %v244
    %v249 = vtanh.pop %v245
    %v250 = vadd.f32 %v246, 1.0
    %v251 = vadd.f32 %v247, 1.0
    %v252 = vadd.f32 %v248, 1.0
    %v253 = vadd.f32 %v249, 1.0
    %v254 = vmul.f32 %v222, %v250
    %v255 = vmul.f32 %v223, %v251
    %v256 = vmul.f32 %v224, %v252
    %v257 = vmul.f32 %v225, %v253
    %v258 = vpack.c.bf16 %v256, %v254
    %v259 = vpack.c.bf16 %v257, %v255
    %v260 = vld [vmem:[#allocation7] sm:$0xf]
    %v261 = vld [vmem:[#allocation7 + $0x4] sm:$0xf]
    %v262 = vld [vmem:[#allocation7 + $0x8] sm:$0xf]
    %v263 = vld [vmem:[#allocation7 + $0xc] sm:$0xf]
    %v264 = vld [vmem:[#allocation7 + $0x10] sm:$0xf]
    %v265 = vld [vmem:[#allocation7 + $0x14] sm:$0xf]
    %v266 = vld [vmem:[#allocation7 + $0x18] sm:$0xf]
    %v267 = vld [vmem:[#allocation7 + $0x1c] sm:$0xf]
    %v268 = vld [vmem:[#allocation7 + $0x20] sm:$0xf]
    %v269 = vld [vmem:[#allocation7 + $0x24] sm:$0xf]
    %v270 = vld [vmem:[#allocation7 + $0x28] sm:$0xf]
    %v271 = vld [vmem:[#allocation7 + $0x2c] sm:$0xf]
    %v272 = vld [vmem:[#allocation7 + $0x30] sm:$0xf]
    %v273 = vld [vmem:[#allocation7 + $0x34] sm:$0xf]
    %v274 = vld [vmem:[#allocation7 + $0x38] sm:$0xf]
    %v275 = vld [vmem:[#allocation7 + $0x3c] sm:$0xf]
    %v276 = vld [vmem:[#allocation7 + $0x40] sm:$0xf]
    %v277 = vld [vmem:[#allocation7 + $0x44] sm:$0xf]
    %v278 = vld [vmem:[#allocation7 + $0x48] sm:$0xf]
    %v279 = vld [vmem:[#allocation7 + $0x4c] sm:$0xf]
    %v280 = vld [vmem:[#allocation7 + $0x50] sm:$0xf]
    %v281 = vld [vmem:[#allocation7 + $0x54] sm:$0xf]
    %v282 = vld [vmem:[#allocation7 + $0x58] sm:$0xf]
    %v283 = vld [vmem:[#allocation7 + $0x5c] sm:$0xf]
    %v284 = vld [vmem:[#allocation7 + $0x60] sm:$0xf]
    %v285 = vld [vmem:[#allocation7 + $0x64] sm:$0xf]
    %v286 = vld [vmem:[#allocation7 + $0x68] sm:$0xf]
    %v287 = vld [vmem:[#allocation7 + $0x6c] sm:$0xf]
    %v288 = vld [vmem:[#allocation7 + $0x70] sm:$0xf]
    %v289 = vld [vmem:[#allocation7 + $0x74] sm:$0xf]
    %v290 = vld [vmem:[#allocation7 + $0x78] sm:$0xf]
    %v291 = vld [vmem:[#allocation7 + $0x7c] sm:$0xf]
    %v292 = vld [vmem:[%s4] sm:$0x1]
    %v294 = vlaneseq
    %v295 = vshrl.u32 %v294, 7
    %v296 = vsub.s32 0, %v295
    %v297 = vrot.slane %v292, %v296
    %v331 = vunpack.c.l.b16 %v260
    %v332 = vunpack.c.l.b16 %v261
    %v333 = vunpack.c.l.b16 %v262
    %v334 = vunpack.c.l.b16 %v263
    %v335 = vunpack.c.l.b16 %v264
    %v336 = vunpack.c.l.b16 %v265
    %v337 = vunpack.c.l.b16 %v266
    %v338 = vunpack.c.l.b16 %v267
    %v339 = vunpack.c.l.b16 %v268
    %v340 = vunpack.c.l.b16 %v269
    %v341 = vunpack.c.l.b16 %v270
    %v342 = vunpack.c.l.b16 %v271
    %v343 = vunpack.c.l.b16 %v272
    %v344 = vunpack.c.l.b16 %v273
    %v345 = vunpack.c.l.b16 %v274
    %v346 = vunpack.c.l.b16 %v275
    %v347 = vunpack.c.l.b16 %v276
    %v348 = vunpack.c.l.b16 %v277
    %v349 = vunpack.c.l.b16 %v278
    %v350 = vunpack.c.l.b16 %v279
    %v351 = vunpack.c.l.b16 %v280
    %v352 = vunpack.c.l.b16 %v281
    %v353 = vunpack.c.l.b16 %v282
    %v354 = vunpack.c.l.b16 %v283
    %v355 = vunpack.c.l.b16 %v284
    %v356 = vunpack.c.l.b16 %v285
    %v357 = vunpack.c.l.b16 %v286
    %v358 = vunpack.c.l.b16 %v287
    %v359 = vunpack.c.l.b16 %v288
    %v360 = vunpack.c.l.b16 %v289
    %v361 = vunpack.c.l.b16 %v290
    %v362 = vunpack.c.l.b16 %v291
    %v363 = vpack.c.b16 %v332, %v331
    %v364 = vpack.c.b16 %v334, %v333
    %v365 = vpack.c.b16 %v336, %v335
    %v366 = vpack.c.b16 %v338, %v337
    %v367 = vpack.c.b16 %v340, %v339
    %v368 = vpack.c.b16 %v342, %v341
    %v369 = vpack.c.b16 %v344, %v343
    %v370 = vpack.c.b16 %v346, %v345
    %v371 = vpack.c.b16 %v348, %v347
    %v372 = vpack.c.b16 %v350, %v349
    %v373 = vpack.c.b16 %v352, %v351
    %v374 = vpack.c.b16 %v354, %v353
    %v375 = vpack.c.b16 %v356, %v355
    %v376 = vpack.c.b16 %v358, %v357
    %v377 = vpack.c.b16 %v360, %v359
    %v378 = vpack.c.b16 %v362, %v361
    %395 = vmatprep.subr.bf16.mxu0 0
    %396 = vmatpush1.bf16.msra.mxu0 %v363
    %397 = vmatprep.subr.bf16.mxu0 0
    %398 = vmatpush1.bf16.msra.mxu0 %v364
    %399 = vmatprep.subr.bf16.mxu0 0
    %400 = vmatpush1.bf16.msra.mxu0 %v365
    %401 = vmatprep.subr.bf16.mxu0 0
    %402 = vmatpush1.bf16.msra.mxu0 %v366
    %403 = vmatprep.subr.bf16.mxu0 0
    %404 = vmatpush1.bf16.msra.mxu0 %v367
    %405 = vmatprep.subr.bf16.mxu0 0
    %406 = vmatpush1.bf16.msra.mxu0 %v368
    %407 = vmatprep.subr.bf16.mxu0 0
    %408 = vmatpush1.bf16.msra.mxu0 %v369
    %409 = vmatprep.subr.bf16.mxu0 0
    %410 = vmatpush1.bf16.msra.mxu0 %v370
    %411 = vmatprep.subr.bf16.mxu0 0
    %412 = vmatpush1.bf16.msra.mxu0 %v371
    %413 = vmatprep.subr.bf16.mxu0 0
    %414 = vmatpush1.bf16.msra.mxu0 %v372
    %415 = vmatprep.subr.bf16.mxu0 0
    %416 = vmatpush1.bf16.msra.mxu0 %v373
    %417 = vmatprep.subr.bf16.mxu0 0
    %418 = vmatpush1.bf16.msra.mxu0 %v374
    %419 = vmatprep.subr.bf16.mxu0 0
    %420 = vmatpush1.bf16.msra.mxu0 %v375
    %421 = vmatprep.subr.bf16.mxu0 0
    %422 = vmatpush1.bf16.msra.mxu0 %v376
    %423 = vmatprep.subr.bf16.mxu0 0
    %424 = vmatpush1.bf16.msra.mxu0 %v377
    %425 = vmatprep.subr.bf16.mxu0 0
    %426 = vmatpush1.bf16.msra.mxu0 %v378
    %427 = vmatprep.mubr.bf16.mxu0 %v259
    %428 = vmatmul.mubr.bf16.gmra.mrb[0].mxu0 %v258
    %v429 = vpop.f32.mrb[0].mxu0
    %v430 = vadd.f32 %v297, %v429
    %v431 = vpop.f32.mrb[0].mxu0
    %v432 = vpop.f32.mrb[0].mxu0
    %v433 = vadd.f32 %v297, %v432
    %v434 = vpop.f32.mrb[0].mxu0
    %435 = vdwg.mxu0
    %436 = vst [vmem:[#allocation8] sm:$0xff] %v430
    %437 = vst [vmem:[#allocation8 + $0x8] sm:$0xff] %v433
    // Predicated region
    $region34: #{tpu_custom_call.1} parent=1 // pred_check
      _
    $region35: #{tpu_custom_call.1} parent=1 // pred_check_branch
      %439 = sbr.rel (0) target = $region37
    $region36: #{tpu_custom_call.1} parent=1 // pred_region
      %s441 = ssub.s32 256, 256
      %442 = vsyncadd [#allocation4], %s441
      %s443 = sshll.u32 [#allocation8], 4
      %s444 = int_to_ptr.vmem [resolvable:$true] %s443
      %449 = dma.vmem_to_hbm [thread:$0]  %s444, 256, %s5, [#allocation4], 128, 128, 8
    $region37: #{tpu_custom_call.1} parent=1 // pred_fallthru
      _
    // Predicated region
    $region38: #{tpu_custom_call.1} parent=1 // pred_check
      _
    $region39: #{tpu_custom_call.1} parent=1 // pred_check_branch
      %451 = sbr.rel (0) target = $region41
    $region40: #{tpu_custom_call.1} parent=1 // pred_region
      %452 = dma.done [#allocation4], 256
    $region41: #{tpu_custom_call.1} parent=1 // pred_fallthru
      _
    %453 = vsyncpa [#allocation3], 1
    %454 = vsyncpa [#allocation6], 1
    %455 = vsyncpa [#allocation4], 1

</llo_original>
